<compile_context>
chip_gen: v7x
topology: tpu7x:2x2x1
jax: 0.10.0
libtpu: 0.0.40
codegen_flags: <defaults>
</compile_context>

<pallas_src>
import jax
import jax.numpy as jnp
from jax.experimental import pallas as pl
from jax.experimental.pallas import tpu as pltpu


def _round_up(x: int, m: int) -> int:
    return (x + m - 1) // m * m


def _lorentz_inclusion_kernel(inv_k_ref, u_ref, out_ref):
    # inv_k_ref: (1,) f32 in SMEM
    # u_ref:     (TB, D)     input tile (native dtype)
    # out_ref:   (TB, D + 1) output tile; column 0 holds the time coordinate.
    u = u_ref[...]

    # Time coordinate: reduce and sqrt in f32 regardless of input dtype.
    # TODO(synk): k <= 0 yields sqrt of a possibly negative argument (NaN),
    # matching the reference math; no clamp is applied here.
    uf = u.astype(jnp.float32)
    sq_norm = jnp.sum(uf * uf, axis=-1, keepdims=True)          # (TB, 1)
    time = jnp.sqrt(sq_norm + inv_k_ref[0])                     # (TB, 1)

    # Build the full (TB, D+1) tile in-register and issue a single full-width
    # store (avoids two separate lane-offset masked slice stores).  Only the
    # 1-wide time column takes the f32 -> out-dtype cast; u is passed through
    # in its native dtype.
    out_ref[...] = jnp.concatenate([time.astype(out_ref.dtype), u], axis=-1)


def lorentz_inclusion(u: jax.Array, k, *, tb=None,
                      tile_vmem_budget_bytes: int = 40 * 1024 * 1024) -> jax.Array:
    """Lift u:(..., D) onto the Lorentz hyperboloid -> (..., D+1) via Pallas."""
    *lead, D = u.shape
    u2 = u.reshape(-1, D)
    B = u2.shape[0]
    itemsize = u2.dtype.itemsize

    # Sublane packing factor: 8 rows for 4-byte, 16 for 2-byte, 32 for 1-byte.
    pack = max(8, 8 * (4 // max(1, itemsize)))

    # Lane-padding-aware per-row VMEM cost: input (tb, D) and output (tb, D+1)
    # tiles both pad the lane dim to a multiple of 128, and each is
    # double-buffered by the BlockSpec pipeline.
    per_row_vmem = 2 * (_round_up(D, 128) + _round_up(D + 1, 128)) * itemsize

    if tb is None:
        tb_max = max(pack, (tile_vmem_budget_bytes // per_row_vmem) // pack * pack)
        n_tiles = pl.cdiv(B, tb_max)
        if n_tiles == 1 and B >= 2 * 2048:
            # Medium/large single-tile batch: split in two so both v7x
            # TensorCores (parallel grid axis) get work.
            n_tiles = 2
        if n_tiles > 1 and n_tiles % 2:
            # Even number of grid steps -> balanced 2-core sharding on v7x.
            n_tiles += 1
        tb = _round_up(pl.cdiv(B, n_tiles), pack)
    tb = max(pack, _round_up(int(tb), pack))
    tb = min(tb, _round_up(B, pack))

    grid = pl.cdiv(B, tb)

    # Raise the scoped VMEM limit to cover the double-buffered tiles (default
    # scoped limits are 16/32 MiB); default budget keeps this <= ~44 MiB so it
    # also fits v7x's 64 MiB physical VMEM with headroom.
    footprint = per_row_vmem * tb
    vmem_limit = int(max(32 * 1024 * 1024, footprint + 4 * 1024 * 1024))

    # Curvature as an SMEM scalar operand: no recompile per distinct k, and k
    # may itself be a traced value.
    inv_k = jnp.asarray(1.0 / k, dtype=jnp.float32).reshape((1,))

    out = pl.pallas_call(
        _lorentz_inclusion_kernel,
        out_shape=jax.ShapeDtypeStruct((B, D + 1), u2.dtype),
        grid=(grid,),
        in_specs=[
            pl.BlockSpec(memory_space=pltpu.MemorySpace.SMEM),   # inv_k
            pl.BlockSpec((tb, D), lambda i: (i, 0)),             # u tile
        ],
        out_specs=pl.BlockSpec((tb, D + 1), lambda i: (i, 0)),
        compiler_params=pltpu.CompilerParams(
            dimension_semantics=("parallel",),
            vmem_limit_bytes=vmem_limit,
        ),
    )(inv_k, u2)

    return out.reshape(*lead, D + 1)


class LorentzInclusion:
    """JAX/Pallas port of the PyTorch LorentzInclusion module."""

    def __init__(self, k: float):
        self.k = float(k)

    def __call__(self, u: jax.Array) -> jax.Array:
        return lorentz_inclusion(u, self.k)


def _reference(u, k):
    time = jnp.sqrt(1.0 / k + jnp.sum(
        u.astype(jnp.float32) ** 2, axis=-1, keepdims=True))
    return jnp.concatenate([time.astype(u.dtype), u], axis=-1)


if __name__ == "__main__":
    key = jax.random.PRNGKey(0)
    k = 1.0

    # Small, non-multiple-of-8 batch (exercises the partial-block path).
    B, D = 10, 32
    u = jax.random.normal(key, (B, D), dtype=jnp.float32)

    module = LorentzInclusion(k)
    out = jax.block_until_ready(module(u))
    ref = _reference(u, k)
    assert out.shape == (B, D + 1), out.shape
    assert jnp.allclose(out, ref, atol=1e-5, rtol=1e-5), "mismatch vs reference"

    # Multi-tile grid with a ragged last block (grid=2, last block 2 valid rows).
    out2 = jax.block_until_ready(lorentz_inclusion(u, k, tb=8))
    assert jnp.allclose(out2, ref, atol=1e-5, rtol=1e-5), "multi-tile mismatch"

    # Leading-dims path.
    u3 = jax.random.normal(jax.random.PRNGKey(1), (2, 5, D), dtype=jnp.float32)
    out3 = jax.block_until_ready(lorentz_inclusion(u3, k))
    assert out3.shape == (2, 5, D + 1)
    assert jnp.allclose(out3, _reference(u3, k), atol=1e-5, rtol=1e-5), "3d mismatch"

    print("KERNEL_OK")
</pallas_src>

<mosaic_0001>
module attributes {stable_mosaic.version = 11 : i64} {
  func.func @_lorentz_inclusion_kernel(%arg0: i32, %arg1: memref<1xf32, #tpu.memory_space<smem>>, %arg2: memref<16x32xf32, #tpu.memory_space<vmem>>, %arg3: memref<16x33xf32, #tpu.memory_space<vmem>>) attributes {dimension_semantics = [#tpu.dimension_semantics<parallel>], iteration_bounds = array<i64: 1>, scalar_prefetch = 0 : i64, scratch_operands = 0 : i64, tpu.core_type = #tpu.core_type<tc>, window_params = [{transform_indices = @transform_0, window_bounds = array<i64: 1>}, {transform_indices = @transform_1, window_bounds = array<i64: 16, 32>}, {transform_indices = @transform_2, window_bounds = array<i64: 16, 33>}]} {
    %c0 = arith.constant 0 : index
    %c0_0 = arith.constant 0 : index
    %0 = vector.load %arg2[%c0, %c0_0] : memref<16x32xf32, #tpu.memory_space<vmem>>, vector<16x32xf32>
    %1 = arith.mulf %0, %0 : vector<16x32xf32>
    %cst = arith.constant dense<0.000000e+00> : vector<16xf32>
    %2 = vector.multi_reduction <add>, %1, %cst [1] : vector<16x32xf32> to vector<16xf32>
    %3 = vector.shape_cast %2 : vector<16xf32> to vector<16x1xf32>
    %c0_1 = arith.constant 0 : index
    %4 = memref.load %arg1[%c0_1] : memref<1xf32, #tpu.memory_space<smem>>
    %5 = vector.broadcast %4 : f32 to vector<16x1xf32>
    %6 = arith.addf %3, %5 : vector<16x1xf32>
    %7 = math.sqrt %6 : vector<16x1xf32>
    %8 = tpu.concatenate %7, %0 in 1 : vector<16x1xf32>, vector<16x32xf32> -> vector<16x33xf32>
    %c0_2 = arith.constant 0 : index
    %c0_3 = arith.constant 0 : index
    %9 = vector.load %arg3[%c0_2, %c0_3] : memref<16x33xf32, #tpu.memory_space<vmem>>, vector<16x33xf32>
    tpu.vector_store %arg3[%c0_2, %c0_3], %8 {strides = array<i32>} : memref<16x33xf32, #tpu.memory_space<vmem>>, vector<16x33xf32>,
    return
  }
  func.func @transform_0(%arg0: i32) -> i32 {
    %c0_i32 = arith.constant 0 : i32
    %c0_i32_0 = arith.constant 0 : i32
    return %c0_i32 : i32
  }
  func.func @transform_1(%arg0: i32) -> (i32, i32) {
    %c0_i32 = arith.constant 0 : i32
    %c0_i32_0 = arith.constant 0 : i32
    return %arg0, %c0_i32 : i32, i32
  }
  func.func @transform_2(%arg0: i32) -> (i32, i32) {
    %c0_i32 = arith.constant 0 : i32
    %c0_i32_0 = arith.constant 0 : i32
    return %arg0, %c0_i32 : i32, i32
  }
}

</mosaic_0001>

<llo_original>
// kernel: tpu_custom_call.1
$region0: #{tpu_custom_call.1}
  #allocation0 [shape = 'u32[]', space=smem, size = 0x4, offset = 0x4, fixed_abs, tag = 'smem constant byte address 0x4 - core index']
  #allocation1 [shape = 'u32[144,128]{1,0:T(1,128)}', space=vmem, size = 0x12000, scoped, tag = 'internal scratch']
  #allocation2 [shape = 'f32[1]{0:T(128)S(6)}', space=smem, size = 0x200, scoped, tag = 'scoped memory for tpu_custom_call.1']
  %s0 = inlined_call_operand.<no memory space> [shape: f32[1], index: 0, kind: input, shape index: {}]
  %s1 = inlined_call_operand.hbm [shape: f32[10,32], index: 1, kind: input, shape index: {}]
  %s2 = inlined_call_operand.hbm [shape: f32[10,33], index: 2, kind: output, shape index: {}]
  %s3 = sld [smem:[#allocation0]]
  $region22: #{tpu_custom_call.1} parent=0
    _
  %s5 = ssub.s32 1, %s3
  %s6 = scalar_select 0, %s5, %s3
  %7 = sst [smem:[#allocation2]] %s0
  $region1: #{tpu_custom_call.1} parent=0
    #allocation3 [shape = 'u8[8192]{0}', space=vmem, size = 0x2000, scoped, tag = 'input window, operand 1, single buffered']
    #allocation4 [shape = 's32[1]{0}', space=sflag, size = 0x4, scoped, tag = 'scoped memory for tpu_custom_call.1']
    #allocation5 [shape = 's32[1]{0}', space=sflag, size = 0x4, scoped, tag = 'scoped memory for tpu_custom_call.1']
    #allocation6 [shape = 'u8[8192]{0}', space=vmem, size = 0x2000, scoped, tag = 'output window, operand 0, single buffered']
    %8 = vsyncpa [#allocation4], 0
    %9 = vsyncpa [#allocation5], 0
    // Predicated region
    $region2: #{tpu_custom_call.1} parent=1 // pred_check
      _
    $region3: #{tpu_custom_call.1} parent=1 // pred_check_branch
      %11 = sbr.rel (0) target = $region5
    $region4: #{tpu_custom_call.1} parent=1 // pred_region
      _
    $region5: #{tpu_custom_call.1} parent=1 // pred_fallthru
      _
    // Predicated region
    $region6: #{tpu_custom_call.1} parent=1 // pred_check
      _
    $region7: #{tpu_custom_call.1} parent=1 // pred_check_branch
      %13 = sbr.rel (0) target = $region9
    $region8: #{tpu_custom_call.1} parent=1 // pred_region
      %s15 = ssub.s32 256, 256
      %16 = vsyncadd [#allocation4], %s15
      %s17 = sshll.u32 [#allocation3], 4
      %s18 = int_to_ptr.vmem [resolvable:$true] %s17
      %23 = dma.hbm_to_vmem [thread:$0]  %s1, 256, %s18, [#allocation4], 128, 128, 8
    $region9: #{tpu_custom_call.1} parent=1 // pred_fallthru
      _
    // Predicated region
    $region10: #{tpu_custom_call.1} parent=1 // pred_check
      _
    $region11: #{tpu_custom_call.1} parent=1 // pred_check_branch
      %25 = sbr.rel (0) target = $region13
    $region12: #{tpu_custom_call.1} parent=1 // pred_region
      %26 = dma.done [#allocation4], 256
    $region13: #{tpu_custom_call.1} parent=1 // pred_fallthru
      _
    %v27 = vld [vmem:[#allocation3] sm:$0xff]
    %v28 = vld [vmem:[#allocation3 + $0x8] sm:$0xff]
    %v29 = vmul.f32 %v27, %v27
    %v30 = vmul.f32 %v28, %v28
    %vm31 = vcmask 261120
    %v32 = vsel %vm31, %v29, 0.0
    %33 = vadd.xlane.f32.xlu0 %v32
    %v34 = vpop.xlane.xlu0 %33
    %v35 = vsel %vm31, %v30, 0.0
    %36 = vadd.xlane.f32.xlu0 %v35
    %v37 = vpop.xlane.xlu0 %36
    %s38 = sld [smem:[#allocation2]]
    %v39 = vstv %s38
    %v40 = vadd.f32 %v34, %v39
    %v41 = vadd.f32 %v37, %v39
    %v42 = vrsqrt.pop %v40
    %v43 = vmul.f32 %v40, %v42
    %vm44 = vcmp.eq.f32.partialorder %v40, inf
    %v45 = vsel %vm44, %v40, %v43
    %vm46 = vcmp.eq.f32.partialorder %v40, 0.0
    %v47 = vand.u32 %v40, 2147483648
    %v48 = vsel %vm46, %v47, %v45
    %v49 = vrsqrt.pop %v41
    %v50 = vmul.f32 %v41, %v49
    %vm51 = vcmp.eq.f32.partialorder %v41, inf
    %v52 = vsel %vm51, %v41, %v50
    %vm53 = vcmp.eq.f32.partialorder %v41, 0.0
    %v54 = vand.u32 %v41, 2147483648
    %v55 = vsel %vm53, %v54, %v52
    %58 = vrot.lane.b32.xlu0 %v27, 1
    %v59 = vpop.permute.xlu0 %58
    %60 = vrot.lane.b32.xlu0 %v28, 1
    %v61 = vpop.permute.xlu0 %60
    %vm64 = vcmask 7168
    %v65 = vsel %vm64, %v48, %v59
    %v66 = vsel %vm64, %v55, %v61
    %vm67 = vcmask 269312
    %68 = vst.msk [vmem:[#allocation6] sm:$0xff] %vm67, %v65
    %69 = vst.msk [vmem:[#allocation6 + $0x8] sm:$0xff] %vm67, %v66
    // Predicated region
    $region14: #{tpu_custom_call.1} parent=1 // pred_check
      _
    $region15: #{tpu_custom_call.1} parent=1 // pred_check_branch
      %71 = sbr.rel (0) target = $region17
    $region16: #{tpu_custom_call.1} parent=1 // pred_region
      %s73 = ssub.s32 256, 256
      %74 = vsyncadd [#allocation5], %s73
      %s75 = sshll.u32 [#allocation6], 4
      %s76 = int_to_ptr.vmem [resolvable:$true] %s75
      %81 = dma.vmem_to_hbm [thread:$0]  %s76, 256, %s2, [#allocation5], 128, 128, 8
    $region17: #{tpu_custom_call.1} parent=1 // pred_fallthru
      _
    // Predicated region
    $region18: #{tpu_custom_call.1} parent=1 // pred_check
      _
    $region19: #{tpu_custom_call.1} parent=1 // pred_check_branch
      %83 = sbr.rel (0) target = $region21
    $region20: #{tpu_custom_call.1} parent=1 // pred_region
      %84 = dma.done [#allocation5], 256
    $region21: #{tpu_custom_call.1} parent=1 // pred_fallthru
      _
    %85 = vsyncpa [#allocation4], 1
    %86 = vsyncpa [#allocation5], 1

</llo_original>
